<compile_context>
chip_gen: v7x
topology: tpu7x:2x2x1
jax: 0.10.0
libtpu: 0.0.40
codegen_flags: <defaults>
</compile_context>

<pallas_src>
import jax
import jax.numpy as jnp
from jax.experimental import pallas as pl
from jax.experimental.pallas import tpu as pltpu


def _round_up(x, m):
    return (x + m - 1) // m * m


def classifier_fact_kernel(x_ref, w_ref, b_ref, out_ref):
    # x_ref  : VMEM [B, TS, H]   (native dtype: f32 or bf16)
    # w_ref  : VMEM [1, H]       (nn.Linear(hidden, 1).weight, cast to x dtype)
    # b_ref  : SMEM [1, 1]       (nn.Linear(hidden, 1).bias, f32)
    # out_ref: VMEM [B, TS]      float32
    x = x_ref[...]                                   # [B, TS, H]
    w = w_ref[...]                                   # [1, H] -> broadcasts over B, TS
    # Linear(H -> 1) + squeeze(-1): multiply in native dtype, accumulate in f32.
    h = jnp.sum(x * w, axis=-1, dtype=jnp.float32) + b_ref[0, 0]   # [B, TS] f32
    out_ref[...] = jax.nn.sigmoid(h).astype(out_ref.dtype)


def classifier_fact(x, weight, bias, *, tile_s=None, target_tile_bytes=8 * 1024 * 1024):
    """x: [B, S, H]; weight: [1, H] (PyTorch layout); bias: [1]. Returns [B, S] f32."""
    B, S, H = x.shape
    itemsize = jnp.dtype(x.dtype).itemsize

    # --- pick a sequence tile: multiple of 128 lanes, input block <= ~8 MiB ---
    if tile_s is None:
        ts = target_tile_bytes // max(1, B * H * itemsize)
        ts = max(128, (ts // 128) * 128)           # lane-dense output, >=128
        ts = min(ts, _round_up(S, 128))            # don't tile past (padded) S
    else:
        ts = tile_s

    s_pad = _round_up(S, ts)
    x_p = x if s_pad == S else jnp.pad(x, ((0, 0), (0, s_pad - S), (0, 0)))

    w = weight.reshape(1, H).astype(x.dtype)
    b_smem = jnp.asarray(bias, jnp.float32).reshape(1, 1)

    grid = (s_pad // ts,)

    # VMEM budget: 2x double-buffered input block + 2x output block + weight + slack.
    in_block = _round_up(B, 8) * ts * _round_up(H, 128) * itemsize
    out_block = _round_up(B, 8) * ts * 4
    vmem_limit = int(min(64 * 1024 * 1024,
                         2 * in_block + 2 * out_block + _round_up(H, 128) * 4 + (4 << 20)))

    out = pl.pallas_call(
        classifier_fact_kernel,
        out_shape=jax.ShapeDtypeStruct((B, s_pad), jnp.float32),
        grid=grid,
        in_specs=[
            pl.BlockSpec((B, ts, H), lambda s: (0, s, 0)),                       # activations (tiled)
            pl.BlockSpec((1, H), lambda s: (0, 0)),                              # weight (resident)
            pl.BlockSpec((1, 1), lambda s: (0, 0), memory_space=pltpu.SMEM),     # bias scalar
        ],
        out_specs=pl.BlockSpec((B, ts), lambda s: (0, s)),
        compiler_params=pltpu.CompilerParams(
            dimension_semantics=("parallel",),
            vmem_limit_bytes=vmem_limit,
        ),
        cost_estimate=pl.CostEstimate(
            flops=2 * B * S * H,
            transcendentals=B * S,
            bytes_accessed=B * S * H * itemsize + B * S * 4 + H * itemsize + 4,
        ),
    )(x_p, w, b_smem)

    return out[:, :S] if s_pad != S else out


if __name__ == "__main__":
    # Small shapes consistent with the module's forward: [batch, seq, hidden]
    B, S, H = 2, 8, 32

    key = jax.random.PRNGKey(0)
    kx, kw, kb = jax.random.split(key, 3)

    x = jax.random.normal(kx, (B, S, H), dtype=jnp.float32)
    # Deterministic synthetic parameters (nn.Linear(hidden_size, 1) shapes)
    weight = jax.random.normal(kw, (1, H), dtype=jnp.float32) * 0.1
    bias = jax.random.normal(kb, (1,), dtype=jnp.float32) * 0.1

    out = classifier_fact(x, weight, bias)
    out = jax.block_until_ready(out)

    # Pure-JAX reference for sanity check
    ref = jax.nn.sigmoid(jnp.einsum("bsh,oh->bso", x, weight)[..., 0] + bias[0])
    assert out.shape == (B, S)
    assert out.dtype == jnp.float32
    assert jnp.allclose(out, ref, atol=1e-5, rtol=1e-5)

    print("KERNEL_OK")
</pallas_src>

<mosaic_0001>
module attributes {stable_mosaic.version = 11 : i64} {
  func.func @classifier_fact_kernel(%arg0: i32, %arg1: memref<2x128x32xf32, #tpu.memory_space<vmem>>, %arg2: memref<1x32xf32, #tpu.memory_space<vmem>>, %arg3: memref<1x1xf32, #tpu.memory_space<smem>>, %arg4: memref<2x128xf32, #tpu.memory_space<vmem>>) attributes {dimension_semantics = [#tpu.dimension_semantics<parallel>], iteration_bounds = array<i64: 1>, scalar_prefetch = 0 : i64, scratch_operands = 0 : i64, tpu.core_type = #tpu.core_type<tc>, window_params = [{transform_indices = @transform_0, window_bounds = array<i64: 2, 128, 32>}, {pipeline_mode = #tpu.pipeline_mode<synchronous>, transform_indices = @transform_1, window_bounds = array<i64: 1, 32>}, {transform_indices = @transform_2, window_bounds = array<i64: 1, 1>}, {transform_indices = @transform_3, window_bounds = array<i64: 2, 128>}]} {
    %c0 = arith.constant 0 : index
    %c0_0 = arith.constant 0 : index
    %c0_1 = arith.constant 0 : index
    %0 = vector.load %arg1[%c0, %c0_0, %c0_1] : memref<2x128x32xf32, #tpu.memory_space<vmem>>, vector<2x128x32xf32>
    %c0_2 = arith.constant 0 : index
    %c0_3 = arith.constant 0 : index
    %1 = vector.load %arg2[%c0_2, %c0_3] : memref<1x32xf32, #tpu.memory_space<vmem>>, vector<1x32xf32>
    %2 = vector.shape_cast %1 : vector<1x32xf32> to vector<1x1x32xf32>
    %3 = vector.broadcast %2 : vector<1x1x32xf32> to vector<2x128x32xf32>
    %4 = arith.mulf %0, %3 : vector<2x128x32xf32>
    %cst = arith.constant dense<0.000000e+00> : vector<2x128xf32>
    %5 = vector.multi_reduction <add>, %4, %cst [2] : vector<2x128x32xf32> to vector<2x128xf32>
    %c0_4 = arith.constant 0 : index
    %c0_5 = arith.constant 0 : index
    %6 = memref.load %arg3[%c0_4, %c0_5] : memref<1x1xf32, #tpu.memory_space<smem>>
    %7 = vector.broadcast %6 : f32 to vector<2x128xf32>
    %8 = arith.addf %5, %7 : vector<2x128xf32>
    %9 = arith.negf %8 : vector<2x128xf32>
    %10 = math.exp %9 : vector<2x128xf32>
    %cst_6 = arith.constant 1.000000e+00 : f32
    %11 = vector.broadcast %cst_6 : f32 to vector<2x128xf32>
    %12 = arith.addf %11, %10 : vector<2x128xf32>
    %13 = arith.divf %11, %12 : vector<2x128xf32>
    %c0_7 = arith.constant 0 : index
    %c0_8 = arith.constant 0 : index
    %14 = vector.load %arg4[%c0_7, %c0_8] : memref<2x128xf32, #tpu.memory_space<vmem>>, vector<2x128xf32>
    tpu.vector_store %arg4[%c0_7, %c0_8], %13 {strides = array<i32>} : memref<2x128xf32, #tpu.memory_space<vmem>>, vector<2x128xf32>,
    return
  }
  func.func @transform_0(%arg0: i32) -> (i32, i32, i32) {
    %c0_i32 = arith.constant 0 : i32
    %c0_i32_0 = arith.constant 0 : i32
    %c0_i32_1 = arith.constant 0 : i32
    return %c0_i32, %arg0, %c0_i32_0 : i32, i32, i32
  }
  func.func @transform_1(%arg0: i32) -> (i32, i32) {
    %c0_i32 = arith.constant 0 : i32
    %c0_i32_0 = arith.constant 0 : i32
    %c0_i32_1 = arith.constant 0 : i32
    return %c0_i32, %c0_i32_0 : i32, i32
  }
  func.func @transform_2(%arg0: i32) -> (i32, i32) {
    %c0_i32 = arith.constant 0 : i32
    %c0_i32_0 = arith.constant 0 : i32
    %c0_i32_1 = arith.constant 0 : i32
    return %c0_i32, %c0_i32_0 : i32, i32
  }
  func.func @transform_3(%arg0: i32) -> (i32, i32) {
    %c0_i32 = arith.constant 0 : i32
    %c0_i32_0 = arith.constant 0 : i32
    return %c0_i32, %arg0 : i32, i32
  }
}

</mosaic_0001>

<llo_original>
// kernel: tpu_custom_call.1
$region0: #{tpu_custom_call.1}
  #allocation0 [shape = 'u32[]', space=smem, size = 0x4, offset = 0x4, fixed_abs, tag = 'smem constant byte address 0x4 - core index']
  #allocation1 [shape = 'u32[144,128]{1,0:T(1,128)}', space=vmem, size = 0x12000, scoped, tag = 'internal scratch']
  #allocation2 [shape = 'f32[1,1]{1,0:T(1,128)S(6)}', space=smem, size = 0x200, scoped, tag = 'scoped memory for tpu_custom_call.1']
  %s0 = inlined_call_operand.vmem [shape: f32[2,128,32], index: 0, kind: input, shape index: {}]
  %s1 = inlined_call_operand.vmem [shape: f32[1,32], index: 1, kind: input, shape index: {}]
  %s2 = inlined_call_operand.<no memory space> [shape: f32[1,1], index: 2, kind: input, shape index: {}]
  %s3 = inlined_call_operand.hbm [shape: f32[2,128], index: 3, kind: output, shape index: {}]
  %s4 = sld [smem:[#allocation0]]
  $region22: #{tpu_custom_call.1} parent=0
    _
  %s6 = ssub.s32 1, %s4
  %s7 = scalar_select 0, %s6, %s4
  %8 = sst [smem:[#allocation2]] %s2
  $region1: #{tpu_custom_call.1} parent=0
    #allocation3 [shape = 'u8[1024]{0}', space=vmem, size = 0x400, scoped, tag = 'output window, operand 0, single buffered']
    #allocation4 [shape = 's32[1]{0}', space=sflag, size = 0x4, scoped, tag = 'scoped memory for tpu_custom_call.1']
    %9 = vsyncpa [#allocation4], 0
    // Predicated region
    $region2: #{tpu_custom_call.1} parent=1 // pred_check
      _
    $region3: #{tpu_custom_call.1} parent=1 // pred_check_branch
      %11 = sbr.rel (0) target = $region5
    $region4: #{tpu_custom_call.1} parent=1 // pred_region
      _
    $region5: #{tpu_custom_call.1} parent=1 // pred_fallthru
      _
    // Predicated region
    $region6: #{tpu_custom_call.1} parent=1 // pred_check
      _
    $region7: #{tpu_custom_call.1} parent=1 // pred_check_branch
      %13 = sbr.rel (0) target = $region9
    $region8: #{tpu_custom_call.1} parent=1 // pred_region
      _
    $region9: #{tpu_custom_call.1} parent=1 // pred_fallthru
      _
    // Predicated region
    $region10: #{tpu_custom_call.1} parent=1 // pred_check
      _
    $region11: #{tpu_custom_call.1} parent=1 // pred_check_branch
      %15 = sbr.rel (0) target = $region13
    $region12: #{tpu_custom_call.1} parent=1 // pred_region
      _
    $region13: #{tpu_custom_call.1} parent=1 // pred_fallthru
      _
    %v16 = vld [vmem:[%s0] sm:$0xff]
    %v17 = vld [vmem:[%s0 + $0x8] sm:$0xff]
    %v18 = vld [vmem:[%s0 + $0x10] sm:$0xff]
    %v19 = vld [vmem:[%s0 + $0x18] sm:$0xff]
    %v20 = vld [vmem:[%s0 + $0x20] sm:$0xff]
    %v21 = vld [vmem:[%s0 + $0x28] sm:$0xff]
    %v22 = vld [vmem:[%s0 + $0x30] sm:$0xff]
    %v23 = vld [vmem:[%s0 + $0x38] sm:$0xff]
    %v24 = vld [vmem:[%s0 + $0x40] sm:$0xff]
    %v25 = vld [vmem:[%s0 + $0x48] sm:$0xff]
    %v26 = vld [vmem:[%s0 + $0x50] sm:$0xff]
    %v27 = vld [vmem:[%s0 + $0x58] sm:$0xff]
    %v28 = vld [vmem:[%s0 + $0x60] sm:$0xff]
    %v29 = vld [vmem:[%s0 + $0x68] sm:$0xff]
    %v30 = vld [vmem:[%s0 + $0x70] sm:$0xff]
    %v31 = vld [vmem:[%s0 + $0x78] sm:$0xff]
    %v32 = vld [vmem:[%s0 + $0x80] sm:$0xff]
    %v33 = vld [vmem:[%s0 + $0x88] sm:$0xff]
    %v34 = vld [vmem:[%s0 + $0x90] sm:$0xff]
    %v35 = vld [vmem:[%s0 + $0x98] sm:$0xff]
    %v36 = vld [vmem:[%s0 + $0xa0] sm:$0xff]
    %v37 = vld [vmem:[%s0 + $0xa8] sm:$0xff]
    %v38 = vld [vmem:[%s0 + $0xb0] sm:$0xff]
    %v39 = vld [vmem:[%s0 + $0xb8] sm:$0xff]
    %v40 = vld [vmem:[%s0 + $0xc0] sm:$0xff]
    %v41 = vld [vmem:[%s0 + $0xc8] sm:$0xff]
    %v42 = vld [vmem:[%s0 + $0xd0] sm:$0xff]
    %v43 = vld [vmem:[%s0 + $0xd8] sm:$0xff]
    %v44 = vld [vmem:[%s0 + $0xe0] sm:$0xff]
    %v45 = vld [vmem:[%s0 + $0xe8] sm:$0xff]
    %v46 = vld [vmem:[%s0 + $0xf0] sm:$0xff]
    %v47 = vld [vmem:[%s0 + $0xf8] sm:$0xff]
    %v48 = vld [vmem:[%s1] sm:$0x1]
    %v50 = vlaneseq
    %v51 = vshrl.u32 %v50, 7
    %v52 = vsub.s32 0, %v51
    %v53 = vrot.slane %v48, %v52
    %v55 = vmul.f32 %v16, %v53
    %v56 = vmul.f32 %v17, %v53
    %v57 = vmul.f32 %v18, %v53
    %v58 = vmul.f32 %v19, %v53
    %v59 = vmul.f32 %v20, %v53
    %v60 = vmul.f32 %v21, %v53
    %v61 = vmul.f32 %v22, %v53
    %v62 = vmul.f32 %v23, %v53
    %v63 = vmul.f32 %v24, %v53
    %v64 = vmul.f32 %v25, %v53
    %v65 = vmul.f32 %v26, %v53
    %v66 = vmul.f32 %v27, %v53
    %v67 = vmul.f32 %v28, %v53
    %v68 = vmul.f32 %v29, %v53
    %v69 = vmul.f32 %v30, %v53
    %v70 = vmul.f32 %v31, %v53
    %v71 = vmul.f32 %v32, %v53
    %v72 = vmul.f32 %v33, %v53
    %v73 = vmul.f32 %v34, %v53
    %v74 = vmul.f32 %v35, %v53
    %v75 = vmul.f32 %v36, %v53
    %v76 = vmul.f32 %v37, %v53
    %v77 = vmul.f32 %v38, %v53
    %v78 = vmul.f32 %v39, %v53
    %v79 = vmul.f32 %v40, %v53
    %v80 = vmul.f32 %v41, %v53
    %v81 = vmul.f32 %v42, %v53
    %v82 = vmul.f32 %v43, %v53
    %v83 = vmul.f32 %v44, %v53
    %v84 = vmul.f32 %v45, %v53
    %v85 = vmul.f32 %v46, %v53
    %v86 = vmul.f32 %v47, %v53
    %vm87 = vcmask 261120
    %v88 = vsel %vm87, %v55, 0.0
    %89 = vadd.xlane.f32.xlu0 %v88
    %v90 = vpop.xlane.xlu0 %89
    %v91 = vsel %vm87, %v56, 0.0
    %92 = vadd.xlane.f32.xlu0 %v91
    %v93 = vpop.xlane.xlu0 %92
    %v94 = vsel %vm87, %v57, 0.0
    %95 = vadd.xlane.f32.xlu0 %v94
    %v96 = vpop.xlane.xlu0 %95
    %v97 = vsel %vm87, %v58, 0.0
    %98 = vadd.xlane.f32.xlu0 %v97
    %v99 = vpop.xlane.xlu0 %98
    %v100 = vsel %vm87, %v59, 0.0
    %101 = vadd.xlane.f32.xlu0 %v100
    %v102 = vpop.xlane.xlu0 %101
    %v103 = vsel %vm87, %v60, 0.0
    %104 = vadd.xlane.f32.xlu0 %v103
    %v105 = vpop.xlane.xlu0 %104
    %v106 = vsel %vm87, %v61, 0.0
    %107 = vadd.xlane.f32.xlu0 %v106
    %v108 = vpop.xlane.xlu0 %107
    %v109 = vsel %vm87, %v62, 0.0
    %110 = vadd.xlane.f32.xlu0 %v109
    %v111 = vpop.xlane.xlu0 %110
    %v112 = vsel %vm87, %v63, 0.0
    %113 = vadd.xlane.f32.xlu0 %v112
    %v114 = vpop.xlane.xlu0 %113
    %v115 = vsel %vm87, %v64, 0.0
    %116 = vadd.xlane.f32.xlu0 %v115
    %v117 = vpop.xlane.xlu0 %116
    %v118 = vsel %vm87, %v65, 0.0
    %119 = vadd.xlane.f32.xlu0 %v118
    %v120 = vpop.xlane.xlu0 %119
    %v121 = vsel %vm87, %v66, 0.0
    %122 = vadd.xlane.f32.xlu0 %v121
    %v123 = vpop.xlane.xlu0 %122
    %v124 = vsel %vm87, %v67, 0.0
    %125 = vadd.xlane.f32.xlu0 %v124
    %v126 = vpop.xlane.xlu0 %125
    %v127 = vsel %vm87, %v68, 0.0
    %128 = vadd.xlane.f32.xlu0 %v127
    %v129 = vpop.xlane.xlu0 %128
    %v130 = vsel %vm87, %v69, 0.0
    %131 = vadd.xlane.f32.xlu0 %v130
    %v132 = vpop.xlane.xlu0 %131
    %v133 = vsel %vm87, %v70, 0.0
    %134 = vadd.xlane.f32.xlu0 %v133
    %v135 = vpop.xlane.xlu0 %134
    %v136 = vsel %vm87, %v71, 0.0
    %137 = vadd.xlane.f32.xlu0 %v136
    %v138 = vpop.xlane.xlu0 %137
    %v139 = vsel %vm87, %v72, 0.0
    %140 = vadd.xlane.f32.xlu0 %v139
    %v141 = vpop.xlane.xlu0 %140
    %v142 = vsel %vm87, %v73, 0.0
    %143 = vadd.xlane.f32.xlu0 %v142
    %v144 = vpop.xlane.xlu0 %143
    %v145 = vsel %vm87, %v74, 0.0
    %146 = vadd.xlane.f32.xlu0 %v145
    %v147 = vpop.xlane.xlu0 %146
    %v148 = vsel %vm87, %v75, 0.0
    %149 = vadd.xlane.f32.xlu0 %v148
    %v150 = vpop.xlane.xlu0 %149
    %v151 = vsel %vm87, %v76, 0.0
    %152 = vadd.xlane.f32.xlu0 %v151
    %v153 = vpop.xlane.xlu0 %152
    %v154 = vsel %vm87, %v77, 0.0
    %155 = vadd.xlane.f32.xlu0 %v154
    %v156 = vpop.xlane.xlu0 %155
    %v157 = vsel %vm87, %v78, 0.0
    %158 = vadd.xlane.f32.xlu0 %v157
    %v159 = vpop.xlane.xlu0 %158
    %v160 = vsel %vm87, %v79, 0.0
    %161 = vadd.xlane.f32.xlu0 %v160
    %v162 = vpop.xlane.xlu0 %161
    %v163 = vsel %vm87, %v80, 0.0
    %164 = vadd.xlane.f32.xlu0 %v163
    %v165 = vpop.xlane.xlu0 %164
    %v166 = vsel %vm87, %v81, 0.0
    %167 = vadd.xlane.f32.xlu0 %v166
    %v168 = vpop.xlane.xlu0 %167
    %v169 = vsel %vm87, %v82, 0.0
    %170 = vadd.xlane.f32.xlu0 %v169
    %v171 = vpop.xlane.xlu0 %170
    %v172 = vsel %vm87, %v83, 0.0
    %173 = vadd.xlane.f32.xlu0 %v172
    %v174 = vpop.xlane.xlu0 %173
    %v175 = vsel %vm87, %v84, 0.0
    %176 = vadd.xlane.f32.xlu0 %v175
    %v177 = vpop.xlane.xlu0 %176
    %v178 = vsel %vm87, %v85, 0.0
    %179 = vadd.xlane.f32.xlu0 %v178
    %v180 = vpop.xlane.xlu0 %179
    %v181 = vsel %vm87, %v86, 0.0
    %182 = vadd.xlane.f32.xlu0 %v181
    %v183 = vpop.xlane.xlu0 %182
    %s184 = sld [smem:[#allocation2]]
    %v185 = vstv %s184
    %v186 = vadd.f32 %v90, %v185
    %v187 = vadd.f32 %v93, %v185
    %v188 = vadd.f32 %v96, %v185
    %v189 = vadd.f32 %v99, %v185
    %v190 = vadd.f32 %v102, %v185
    %v191 = vadd.f32 %v105, %v185
    %v192 = vadd.f32 %v108, %v185
    %v193 = vadd.f32 %v111, %v185
    %v194 = vadd.f32 %v114, %v185
    %v195 = vadd.f32 %v117, %v185
    %v196 = vadd.f32 %v120, %v185
    %v197 = vadd.f32 %v123, %v185
    %v198 = vadd.f32 %v126, %v185
    %v199 = vadd.f32 %v129, %v185
    %v200 = vadd.f32 %v132, %v185
    %v201 = vadd.f32 %v135, %v185
    %v202 = vadd.f32 %v138, %v185
    %v203 = vadd.f32 %v141, %v185
    %v204 = vadd.f32 %v144, %v185
    %v205 = vadd.f32 %v147, %v185
    %v206 = vadd.f32 %v150, %v185
    %v207 = vadd.f32 %v153, %v185
    %v208 = vadd.f32 %v156, %v185
    %v209 = vadd.f32 %v159, %v185
    %v210 = vadd.f32 %v162, %v185
    %v211 = vadd.f32 %v165, %v185
    %v212 = vadd.f32 %v168, %v185
    %v213 = vadd.f32 %v171, %v185
    %v214 = vadd.f32 %v174, %v185
    %v215 = vadd.f32 %v177, %v185
    %v216 = vadd.f32 %v180, %v185
    %v217 = vadd.f32 %v183, %v185
    %v218 = vxor.u32 %v186, 2147483648
    %v219 = vxor.u32 %v187, 2147483648
    %v220 = vxor.u32 %v188, 2147483648
    %v221 = vxor.u32 %v189, 2147483648
    %v222 = vxor.u32 %v190, 2147483648
    %v223 = vxor.u32 %v191, 2147483648
    %v224 = vxor.u32 %v192, 2147483648
    %v225 = vxor.u32 %v193, 2147483648
    %v226 = vxor.u32 %v194, 2147483648
    %v227 = vxor.u32 %v195, 2147483648
    %v228 = vxor.u32 %v196, 2147483648
    %v229 = vxor.u32 %v197, 2147483648
    %v230 = vxor.u32 %v198, 2147483648
    %v231 = vxor.u32 %v199, 2147483648
    %v232 = vxor.u32 %v200, 2147483648
    %v233 = vxor.u32 %v201, 2147483648
    %v234 = vxor.u32 %v202, 2147483648
    %v235 = vxor.u32 %v203, 2147483648
    %v236 = vxor.u32 %v204, 2147483648
    %v237 = vxor.u32 %v205, 2147483648
    %v238 = vxor.u32 %v206, 2147483648
    %v239 = vxor.u32 %v207, 2147483648
    %v240 = vxor.u32 %v208, 2147483648
    %v241 = vxor.u32 %v209, 2147483648
    %v242 = vxor.u32 %v210, 2147483648
    %v243 = vxor.u32 %v211, 2147483648
    %v244 = vxor.u32 %v212, 2147483648
    %v245 = vxor.u32 %v213, 2147483648
    %v246 = vxor.u32 %v214, 2147483648
    %v247 = vxor.u32 %v215, 2147483648
    %v248 = vxor.u32 %v216, 2147483648
    %v249 = vxor.u32 %v217, 2147483648
    %v250 = vmul.f32 %v218, 1.442695
    %v251 = vpow.pop %v250
    %v252 = vmul.f32 %v219, 1.442695
    %v253 = vpow.pop %v252
    %v254 = vmul.f32 %v220, 1.442695
    %v255 = vpow.pop %v254
    %v256 = vmul.f32 %v221, 1.442695
    %v257 = vpow.pop %v256
    %v258 = vmul.f32 %v222, 1.442695
    %v259 = vpow.pop %v258
    %v260 = vmul.f32 %v223, 1.442695
    %v261 = vpow.pop %v260
    %v262 = vmul.f32 %v224, 1.442695
    %v263 = vpow.pop %v262
    %v264 = vmul.f32 %v225, 1.442695
    %v265 = vpow.pop %v264
    %v266 = vmul.f32 %v226, 1.442695
    %v267 = vpow.pop %v266
    %v268 = vmul.f32 %v227, 1.442695
    %v269 = vpow.pop %v268
    %v270 = vmul.f32 %v228, 1.442695
    %v271 = vpow.pop %v270
    %v272 = vmul.f32 %v229, 1.442695
    %v273 = vpow.pop %v272
    %v274 = vmul.f32 %v230, 1.442695
    %v275 = vpow.pop %v274
    %v276 = vmul.f32 %v231, 1.442695
    %v277 = vpow.pop %v276
    %v278 = vmul.f32 %v232, 1.442695
    %v279 = vpow.pop %v278
    %v280 = vmul.f32 %v233, 1.442695
    %v281 = vpow.pop %v280
    %v282 = vmul.f32 %v234, 1.442695
    %v283 = vpow.pop %v282
    %v284 = vmul.f32 %v235, 1.442695
    %v285 = vpow.pop %v284
    %v286 = vmul.f32 %v236, 1.442695
    %v287 = vpow.pop %v286
    %v288 = vmul.f32 %v237, 1.442695
    %v289 = vpow.pop %v288
    %v290 = vmul.f32 %v238, 1.442695
    %v291 = vpow.pop %v290
    %v292 = vmul.f32 %v239, 1.442695
    %v293 = vpow.pop %v292
    %v294 = vmul.f32 %v240, 1.442695
    %v295 = vpow.pop %v294
    %v296 = vmul.f32 %v241, 1.442695
    %v297 = vpow.pop %v296
    %v298 = vmul.f32 %v242, 1.442695
    %v299 = vpow.pop %v298
    %v300 = vmul.f32 %v243, 1.442695
    %v301 = vpow.pop %v300
    %v302 = vmul.f32 %v244, 1.442695
    %v303 = vpow.pop %v302
    %v304 = vmul.f32 %v245, 1.442695
    %v305 = vpow.pop %v304
    %v306 = vmul.f32 %v246, 1.442695
    %v307 = vpow.pop %v306
    %v308 = vmul.f32 %v247, 1.442695
    %v309 = vpow.pop %v308
    %v310 = vmul.f32 %v248, 1.442695
    %v311 = vpow.pop %v310
    %v312 = vmul.f32 %v249, 1.442695
    %v313 = vpow.pop %v312
    %v314 = vadd.f32 %v251, 1.0
    %v315 = vadd.f32 %v253, 1.0
    %v316 = vadd.f32 %v255, 1.0
    %v317 = vadd.f32 %v257, 1.0
    %v318 = vadd.f32 %v259, 1.0
    %v319 = vadd.f32 %v261, 1.0
    %v320 = vadd.f32 %v263, 1.0
    %v321 = vadd.f32 %v265, 1.0
    %v322 = vadd.f32 %v267, 1.0
    %v323 = vadd.f32 %v269, 1.0
    %v324 = vadd.f32 %v271, 1.0
    %v325 = vadd.f32 %v273, 1.0
    %v326 = vadd.f32 %v275, 1.0
    %v327 = vadd.f32 %v277, 1.0
    %v328 = vadd.f32 %v279, 1.0
    %v329 = vadd.f32 %v281, 1.0
    %v330 = vadd.f32 %v283, 1.0
    %v331 = vadd.f32 %v285, 1.0
    %v332 = vadd.f32 %v287, 1.0
    %v333 = vadd.f32 %v289, 1.0
    %v334 = vadd.f32 %v291, 1.0
    %v335 = vadd.f32 %v293, 1.0
    %v336 = vadd.f32 %v295, 1.0
    %v337 = vadd.f32 %v297, 1.0
    %v338 = vadd.f32 %v299, 1.0
    %v339 = vadd.f32 %v301, 1.0
    %v340 = vadd.f32 %v303, 1.0
    %v341 = vadd.f32 %v305, 1.0
    %v342 = vadd.f32 %v307, 1.0
    %v343 = vadd.f32 %v309, 1.0
    %v344 = vadd.f32 %v311, 1.0
    %v345 = vadd.f32 %v313, 1.0
    %v346 = vrcp.pop %v314
    %v347 = vmul.f32 1.0, %v346
    %v348 = vrcp.pop %v315
    %v349 = vmul.f32 1.0, %v348
    %v350 = vrcp.pop %v316
    %v351 = vmul.f32 1.0, %v350
    %v352 = vrcp.pop %v317
    %v353 = vmul.f32 1.0, %v352
    %v354 = vrcp.pop %v318
    %v355 = vmul.f32 1.0, %v354
    %v356 = vrcp.pop %v319
    %v357 = vmul.f32 1.0, %v356
    %v358 = vrcp.pop %v320
    %v359 = vmul.f32 1.0, %v358
    %v360 = vrcp.pop %v321
    %v361 = vmul.f32 1.0, %v360
    %v362 = vrcp.pop %v322
    %v363 = vmul.f32 1.0, %v362
    %v364 = vrcp.pop %v323
    %v365 = vmul.f32 1.0, %v364
    %v366 = vrcp.pop %v324
    %v367 = vmul.f32 1.0, %v366
    %v368 = vrcp.pop %v325
    %v369 = vmul.f32 1.0, %v368
    %v370 = vrcp.pop %v326
    %v371 = vmul.f32 1.0, %v370
    %v372 = vrcp.pop %v327
    %v373 = vmul.f32 1.0, %v372
    %v374 = vrcp.pop %v328
    %v375 = vmul.f32 1.0, %v374
    %v376 = vrcp.pop %v329
    %v377 = vmul.f32 1.0, %v376
    %v378 = vrcp.pop %v330
    %v379 = vmul.f32 1.0, %v378
    %v380 = vrcp.pop %v331
    %v381 = vmul.f32 1.0, %v380
    %v382 = vrcp.pop %v332
    %v383 = vmul.f32 1.0, %v382
    %v384 = vrcp.pop %v333
    %v385 = vmul.f32 1.0, %v384
    %v386 = vrcp.pop %v334
    %v387 = vmul.f32 1.0, %v386
    %v388 = vrcp.pop %v335
    %v389 = vmul.f32 1.0, %v388
    %v390 = vrcp.pop %v336
    %v391 = vmul.f32 1.0, %v390
    %v392 = vrcp.pop %v337
    %v393 = vmul.f32 1.0, %v392
    %v394 = vrcp.pop %v338
    %v395 = vmul.f32 1.0, %v394
    %v396 = vrcp.pop %v339
    %v397 = vmul.f32 1.0, %v396
    %v398 = vrcp.pop %v340
    %v399 = vmul.f32 1.0, %v398
    %v400 = vrcp.pop %v341
    %v401 = vmul.f32 1.0, %v400
    %v402 = vrcp.pop %v342
    %v403 = vmul.f32 1.0, %v402
    %v404 = vrcp.pop %v343
    %v405 = vmul.f32 1.0, %v404
    %v406 = vrcp.pop %v344
    %v407 = vmul.f32 1.0, %v406
    %v408 = vrcp.pop %v345
    %v409 = vmul.f32 1.0, %v408
    %v442 = vlaneseq
    %v443 = vand.u32 %v442, 127
    %v444 = vlaneseq
    %v445 = vshrl.u32 %v444, 7
    %v446 = vsub.s32 %v443, %v445
    %v447 = vrot.slane %v347, %v446
    %v448 = vadd.s32 %v443, 4294967288
    %v449 = vlaneseq
    %v450 = vshrl.u32 %v449, 7
    %v451 = vsub.s32 %v448, %v450
    %v452 = vrot.slane %v349, %v451
    %vm453 = vcmask 130112
    %v454 = vsel %vm453, %v452, %v447
    %v455 = vadd.s32 %v443, 4294967280
    %v456 = vlaneseq
    %v457 = vshrl.u32 %v456, 7
    %v458 = vsub.s32 %v455, %v457
    %v459 = vrot.slane %v351, %v458
    %vm460 = vcmask 195712
    %v461 = vsel %vm460, %v459, %v454
    %v462 = vadd.s32 %v443, 4294967272
    %v463 = vlaneseq
    %v464 = vshrl.u32 %v463, 7
    %v465 = vsub.s32 %v462, %v464
    %v466 = vrot.slane %v353, %v465
    %vm467 = vcmask 261312
    %v468 = vsel %vm467, %v466, %v461
    %v469 = vadd.s32 %v443, 4294967264
    %v470 = vlaneseq
    %v471 = vshrl.u32 %v470, 7
    %v472 = vsub.s32 %v469, %v471
    %v473 = vrot.slane %v355, %v472
    %vm474 = vcmask 326912
    %v475 = vsel %vm474, %v473, %v468
    %v476 = vadd.s32 %v443, 4294967256
    %v477 = vlaneseq
    %v478 = vshrl.u32 %v477, 7
    %v479 = vsub.s32 %v476, %v478
    %v480 = vrot.slane %v357, %v479
    %vm481 = vcmask 392512
    %v482 = vsel %vm481, %v480, %v475
    %v483 = vadd.s32 %v443, 4294967248
    %v484 = vlaneseq
    %v485 = vshrl.u32 %v484, 7
    %v486 = vsub.s32 %v483, %v485
    %v487 = vrot.slane %v359, %v486
    %vm488 = vcmask 458112
    %v489 = vsel %vm488, %v487, %v482
    %v490 = vadd.s32 %v443, 4294967240
    %v491 = vlaneseq
    %v492 = vshrl.u32 %v491, 7
    %v493 = vsub.s32 %v490, %v492
    %v494 = vrot.slane %v361, %v493
    %vm495 = vcmask 523712
    %v496 = vsel %vm495, %v494, %v489
    %v497 = vadd.s32 %v443, 4294967232
    %v498 = vlaneseq
    %v499 = vshrl.u32 %v498, 7
    %v500 = vsub.s32 %v497, %v499
    %v501 = vrot.slane %v363, %v500
    %vm502 = vcmask 589312
    %v503 = vsel %vm502, %v501, %v496
    %v504 = vadd.s32 %v443, 4294967224
    %v505 = vlaneseq
    %v506 = vshrl.u32 %v505, 7
    %v507 = vsub.s32 %v504, %v506
    %v508 = vrot.slane %v365, %v507
    %vm509 = vcmask 654912
    %v510 = vsel %vm509, %v508, %v503
    %v511 = vadd.s32 %v443, 4294967216
    %v512 = vlaneseq
    %v513 = vshrl.u32 %v512, 7
    %v514 = vsub.s32 %v511, %v513
    %v515 = vrot.slane %v367, %v514
    %vm516 = vcmask 720512
    %v517 = vsel %vm516, %v515, %v510
    %v518 = vadd.s32 %v443, 4294967208
    %v519 = vlaneseq
    %v520 = vshrl.u32 %v519, 7
    %v521 = vsub.s32 %v518, %v520
    %v522 = vrot.slane %v369, %v521
    %vm523 = vcmask 786112
    %v524 = vsel %vm523, %v522, %v517
    %v525 = vadd.s32 %v443, 4294967200
    %v526 = vlaneseq
    %v527 = vshrl.u32 %v526, 7
    %v528 = vsub.s32 %v525, %v527
    %v529 = vrot.slane %v371, %v528
    %vm530 = vcmask 851712
    %v531 = vsel %vm530, %v529, %v524
    %v532 = vadd.s32 %v443, 4294967192
    %v533 = vlaneseq
    %v534 = vshrl.u32 %v533, 7
    %v535 = vsub.s32 %v532, %v534
    %v536 = vrot.slane %v373, %v535
    %vm537 = vcmask 917312
    %v538 = vsel %vm537, %v536, %v531
    %v539 = vadd.s32 %v443, 4294967184
    %v540 = vlaneseq
    %v541 = vshrl.u32 %v540, 7
    %v542 = vsub.s32 %v539, %v541
    %v543 = vrot.slane %v375, %v542
    %vm544 = vcmask 982912
    %v545 = vsel %vm544, %v543, %v538
    %v546 = vadd.s32 %v443, 4294967176
    %v547 = vlaneseq
    %v548 = vshrl.u32 %v547, 7
    %v549 = vsub.s32 %v546, %v548
    %v550 = vrot.slane %v377, %v549
    %vm551 = vcmask 1048512
    %v552 = vsel %vm551, %v550, %v545
    %v553 = vlaneseq
    %v554 = vshrl.u32 %v553, 7
    %v555 = vsub.s32 %v443, %v554
    %v556 = vrot.slane %v379, %v555
    %v557 = vlaneseq
    %v558 = vshrl.u32 %v557, 7
    %v559 = vsub.s32 %v448, %v558
    %v560 = vrot.slane %v381, %v559
    %v561 = vsel %vm453, %v560, %v556
    %v562 = vlaneseq
    %v563 = vshrl.u32 %v562, 7
    %v564 = vsub.s32 %v455, %v563
    %v565 = vrot.slane %v383, %v564
    %v566 = vsel %vm460, %v565, %v561
    %v567 = vlaneseq
    %v568 = vshrl.u32 %v567, 7
    %v569 = vsub.s32 %v462, %v568
    %v570 = vrot.slane %v385, %v569
    %v571 = vsel %vm467, %v570, %v566
    %v572 = vlaneseq
    %v573 = vshrl.u32 %v572, 7
    %v574 = vsub.s32 %v469, %v573
    %v575 = vrot.slane %v387, %v574
    %v576 = vsel %vm474, %v575, %v571
    %v577 = vlaneseq
    %v578 = vshrl.u32 %v577, 7
    %v579 = vsub.s32 %v476, %v578
    %v580 = vrot.slane %v389, %v579
    %v581 = vsel %vm481, %v580, %v576
    %v582 = vlaneseq
    %v583 = vshrl.u32 %v582, 7
    %v584 = vsub.s32 %v483, %v583
    %v585 = vrot.slane %v391, %v584
    %v586 = vsel %vm488, %v585, %v581
    %v587 = vlaneseq
    %v588 = vshrl.u32 %v587, 7
    %v589 = vsub.s32 %v490, %v588
    %v590 = vrot.slane %v393, %v589
    %v591 = vsel %vm495, %v590, %v586
    %v592 = vlaneseq
    %v593 = vshrl.u32 %v592, 7
    %v594 = vsub.s32 %v497, %v593
    %v595 = vrot.slane %v395, %v594
    %v596 = vsel %vm502, %v595, %v591
    %v597 = vlaneseq
    %v598 = vshrl.u32 %v597, 7
    %v599 = vsub.s32 %v504, %v598
    %v600 = vrot.slane %v397, %v599
    %v601 = vsel %vm509, %v600, %v596
    %v602 = vlaneseq
    %v603 = vshrl.u32 %v602, 7
    %v604 = vsub.s32 %v511, %v603
    %v605 = vrot.slane %v399, %v604
    %v606 = vsel %vm516, %v605, %v601
    %v607 = vlaneseq
    %v608 = vshrl.u32 %v607, 7
    %v609 = vsub.s32 %v518, %v608
    %v610 = vrot.slane %v401, %v609
    %v611 = vsel %vm523, %v610, %v606
    %v612 = vlaneseq
    %v613 = vshrl.u32 %v612, 7
    %v614 = vsub.s32 %v525, %v613
    %v615 = vrot.slane %v403, %v614
    %v616 = vsel %vm530, %v615, %v611
    %v617 = vlaneseq
    %v618 = vshrl.u32 %v617, 7
    %v619 = vsub.s32 %v532, %v618
    %v620 = vrot.slane %v405, %v619
    %v621 = vsel %vm537, %v620, %v616
    %v622 = vlaneseq
    %v623 = vshrl.u32 %v622, 7
    %v624 = vsub.s32 %v539, %v623
    %v625 = vrot.slane %v407, %v624
    %v626 = vsel %vm544, %v625, %v621
    %v627 = vlaneseq
    %v628 = vshrl.u32 %v627, 7
    %v629 = vsub.s32 %v546, %v628
    %v630 = vrot.slane %v409, %v629
    %v631 = vsel %vm551, %v630, %v626
    %vm632 = vcmask 1041409
    %v633 = vsel %vm632, %v631, %v552
    %635 = vst [vmem:[#allocation3] sm:$0x3] %v633
    // Predicated region
    $region14: #{tpu_custom_call.1} parent=1 // pred_check
      _
    $region15: #{tpu_custom_call.1} parent=1 // pred_check_branch
      %637 = sbr.rel (0) target = $region17
    $region16: #{tpu_custom_call.1} parent=1 // pred_region
      %s639 = ssub.s32 32, 32
      %640 = vsyncadd [#allocation4], %s639
      %s642 = sshll.u32 [#allocation3], 4
      %s643 = int_to_ptr.vmem [resolvable:$true] %s642
      %645 = dma.vmem_to_hbm [thread:$0]  %s643, 32, %s3, [#allocation4]
    $region17: #{tpu_custom_call.1} parent=1 // pred_fallthru
      _
    // Predicated region
    $region18: #{tpu_custom_call.1} parent=1 // pred_check
      _
    $region19: #{tpu_custom_call.1} parent=1 // pred_check_branch
      %647 = sbr.rel (0) target = $region21
    $region20: #{tpu_custom_call.1} parent=1 // pred_region
      %648 = dma.done [#allocation4], 32
    $region21: #{tpu_custom_call.1} parent=1 // pred_fallthru
      _
    %649 = vsyncpa [#allocation4], 1

</llo_original>
